<compile_context>
chip_gen: v6e
topology: v6e:2x2x1
jax: 0.10.0
libtpu: 0.0.40
codegen_flags: <defaults>
</compile_context>

<pallas_src>
import functools

import numpy as np
import jax
import jax.numpy as jnp
from jax.experimental import pallas as pl

# ---------------- small config consistent with the module ----------------
H = W = 64
NUM_CHANNELS = 3
PATCH_SIZE = 8
FIXED_LENGTH = 16           # (FIXED_LENGTH - 1) % 3 == 0  (quadtree splits add 3 leaves)
STHS = [0, 1, 3, 5]
CANNYS = [50, 100]


# ======================= kernel 1: fused grayscale + blur + "Canny-ish" edges =======================
def _make_edge_kernel(k, high_thresh, out_h, out_w):
    """Fused grayscale + separable Gaussian + separable Sobel + threshold."""
    if k <= 1:
        k = 1
        w1 = np.ones((1,), np.float32)
    else:
        # cv2.getGaussianKernel default sigma for a given ksize
        sigma = 0.3 * ((k - 1) * 0.5 - 1.0) + 0.8
        r_ = k // 2
        w1 = np.exp(-((np.arange(k) - r_) ** 2) / (2.0 * sigma * sigma))
        w1 = (w1 / w1.sum()).astype(np.float32)
    hb, wb = out_h + 2, out_w + 2           # blurred region needed by the 3x3 Sobel
    thr2 = float(high_thresh) * float(high_thresh)

    def edge_kernel(img_ref, edges_ref):
        # img_ref: (3, out_h + 2 + 2r, out_w + 2 + 2r) reflect-padded image.
        # Grayscale fused in-kernel (Rec.601 weights, ~cv2.cvtColor).
        # TODO(synk): the reference feeds the blurred *color* image to cv.Canny,
        # which is ill-defined for 3 channels; we use a standard luminance mix.
        g = 0.299 * img_ref[0] + 0.587 * img_ref[1] + 0.114 * img_ref[2]

        # Separable Gaussian blur: horizontal 1-D pass then vertical 1-D pass
        # (2k shifted adds instead of k*k, far fewer lane-shifted slices).
        hp = float(w1[0]) * g[:, 0:wb]
        for b in range(1, k):
            hp = hp + float(w1[b]) * g[:, b:b + wb]
        blur = float(w1[0]) * hp[0:hb, :]
        for a in range(1, k):
            blur = blur + float(w1[a]) * hp[a:a + hb, :]

        # Separable Sobel: gx = smooth_y([1,2,1]) * diff_x, gy = smooth_x * diff_y.
        ys = blur[0:out_h, :] + 2.0 * blur[1:out_h + 1, :] + blur[2:out_h + 2, :]
        gx = ys[:, 2:wb] - ys[:, 0:out_w]
        xs = blur[:, 0:out_w] + 2.0 * blur[:, 1:out_w + 1] + blur[:, 2:out_w + 2]
        gy = xs[2:hb, :] - xs[0:out_h, :]

        # TODO(synk): cv.Canny non-max suppression + hysteresis (low threshold)
        # has no clean Pallas equivalent; binarize |grad|^2 against the high
        # threshold squared (sqrt-free, exact equivalent of |grad| >= thresh).
        mag2 = gx * gx + gy * gy
        edges_ref[...] = jnp.where(mag2 >= thr2, 255.0, 0.0)

    return edge_kernel


def edge_map(img_chw, smooth_factor, canny_high):
    k = max(int(smooth_factor), 1)
    pad = k // 2 + 1
    # Reflect pad once on the host (~cv2 BORDER_REFLECT_101); grayscale + blur +
    # Sobel + threshold are all fused into one single-step Pallas kernel.
    img_pad = jnp.pad(img_chw.astype(jnp.float32),
                      ((0, 0), (pad, pad), (pad, pad)), mode="reflect")
    out_h, out_w = img_chw.shape[1], img_chw.shape[2]
    kern = _make_edge_kernel(k, float(canny_high), out_h, out_w)
    return pl.pallas_call(
        kern,
        out_shape=jax.ShapeDtypeStruct((out_h, out_w), jnp.float32),
    )(img_pad)


# ======================= host-side quadtree (data-dependent) =======================
def fixed_quadtree_leaves(edges_np, fixed_length, min_size):
    # TODO(synk): `FixedQuadTree` is not defined in the reference module; this is a
    # greedy edge-density quadtree (repeatedly split the leaf with the largest edge sum).
    h, w = edges_np.shape
    assert h == w, "square domain assumed"
    leaves = [(0, 0, h)]                                            # (y, x, size)
    while len(leaves) < fixed_length:
        best, best_score = None, -1.0
        for i, (y, x, s) in enumerate(leaves):
            if s >= 2 * min_size:
                sc = float(edges_np[y:y + s, x:x + s].sum())
                if sc > best_score:
                    best, best_score = i, sc
        if best is None:
            break
        y, x, s = leaves.pop(best)
        hs = s // 2
        leaves += [(y, x, hs), (y, x + hs, hs), (y + hs, x, hs), (y + hs, x + hs, hs)]
    return leaves


# ======================= kernel 2: all-leaf gather + resize (MXU) =======================
def _serialize_kernel(img_ref, a_row_ref, b_col_ref, mask_ref, out_ref, *, n, p,
                      num_channels):
    """All leaves, all channels, one grid step.

    out[c, r, i*p + q] = sum_{h,w} A_row[i*p + r, h] * img[c, h, w] * B_col[w, i*p + q]
    restricted to the block diagonal (leaf-i rows with leaf-i columns), i.e. the
    area-averaged p x p resize of every leaf.  The two dots are full-size MXU
    matmuls covering all leaves at once; the block-diagonal restriction is a
    cheap VPU mask-and-reduce.  No transposes, no dynamic slices, no tiny
    per-leaf matmuls, lane-dense (p, n*p) stores.
    """
    a_row = a_row_ref[...]                          # (n*p, H)
    b_col = b_col_ref[...]                          # (W, n*p)   (pre-transposed on host)
    mask = mask_ref[...]                            # (n, p, n*p) block-diagonal selector
    for c in range(num_channels):                   # static unroll (3)
        t = jnp.dot(a_row, img_ref[c], preferred_element_type=jnp.float32)   # (n*p, W)
        full = jnp.dot(t, b_col, preferred_element_type=jnp.float32)         # (n*p, n*p)
        out_ref[c] = jnp.sum(jnp.reshape(full, (n, p, n * p)) * mask, axis=0)  # (p, n*p)


def serialize_patches(img_chw, leaves, patch_size):
    c_dim, h, w = img_chw.shape
    n = len(leaves)
    p = patch_size

    # Fold each leaf's (y, x, size) into host-built area-averaging matrices:
    #   A_row (n*p, H) selects + averages rows (y offset folded in),
    #   B_col (W, n*p) selects + averages columns (x offset folded in; already
    #   transposed so the kernel never transposes anything).
    a_row = np.zeros((n * p, h), np.float32)
    b_col = np.zeros((w, n * p), np.float32)
    mask = np.zeros((n, p, n * p), np.float32)
    sizes = np.zeros((n,), np.int32)
    for i, (y, x, s) in enumerate(leaves):
        assert s % p == 0 and s >= p, "leaf size must be a positive multiple of patch_size"
        assert 0 <= y and y + s <= h and 0 <= x and x + s <= w, "leaf out of bounds"
        f = s // p
        inv = 1.0 / f
        for r in range(p):
            a_row[i * p + r, y + r * f:y + (r + 1) * f] = inv
            b_col[x + r * f:x + (r + 1) * f, i * p + r] = inv
        mask[i, :, i * p:(i + 1) * p] = 1.0
        sizes[i] = s

    kern = functools.partial(_serialize_kernel, n=n, p=p, num_channels=c_dim)
    # Single grid step: the whole image (~48 KB), both averaging matrices and
    # the (C, p, n*p) output all live in VMEM at once (<300 KB total), so there
    # is no per-leaf pipeline overhead and the writeback is one lane-dense DMA.
    # TODO(synk): for large images (e.g. 1024^2) switch the image to
    # memory_space=pl.ANY and manually DMA per-leaf row bands (and, for a batch
    # of images, add a leading "parallel" grid axis to use both v7x TensorCores).
    out = pl.pallas_call(
        kern,
        out_shape=jax.ShapeDtypeStruct((c_dim, p, n * p), jnp.float32),
    )(img_chw.astype(jnp.float32), jnp.asarray(a_row), jnp.asarray(b_col),
      jnp.asarray(mask))
    return out, sizes


# ======================= forward (mirrors ImagePatchify.forward) =======================
def image_patchify(img_chw, *, sths=STHS, cannys=CANNYS, fixed_length=FIXED_LENGTH,
                   patch_size=PATCH_SIZE, num_channels=NUM_CHANNELS,
                   smooth_idx=2, canny_idx=25, rng_key=None):
    # Deterministic stand-ins for `random.choice(...)` in the original forward.
    smooth_factor = sths[smooth_idx]                 # -> 3
    canny_list = list(range(cannys[0], cannys[1]))
    c = canny_list[canny_idx]                        # -> 75
    canny = [c, c + 50]

    if smooth_factor == 0:
        key = rng_key if rng_key is not None else jax.random.PRNGKey(0)
        edges = jax.random.uniform(key, (img_chw.shape[1], img_chw.shape[2]),
                                   jnp.float32, 0.0, 1.0)
    else:
        edges = edge_map(img_chw, smooth_factor, canny[1])

    edges_np = np.asarray(jax.device_get(edges))
    leaves = fixed_quadtree_leaves(edges_np, fixed_length, min_size=patch_size)

    seq_cpw, seq_size = serialize_patches(img_chw, leaves, patch_size)   # (C, p, n*p)

    # Lane-dense kernel output -> per-patch HWC (N, p, p, C), then the exact
    # reshape from the reference module.  Pure wrapper-side layout plumbing.
    n = len(leaves)
    seq_nhwc = jnp.transpose(
        jnp.reshape(seq_cpw, (num_channels, patch_size, n, patch_size)),
        (2, 1, 3, 0))                                                    # (N, p, p, C)
    seq_img = jnp.reshape(seq_nhwc, (patch_size * patch_size, -1, num_channels))
    seq_pos = np.asarray([(y, x) for (y, x, _) in leaves], np.int32)
    return seq_img, seq_size, seq_pos


if __name__ == "__main__":
    key = jax.random.PRNGKey(0)
    # layout: CHW float32 image in [0, 255]
    img = jax.random.uniform(key, (NUM_CHANNELS, H, W), jnp.float32, 0.0, 255.0)

    seq_img, seq_size, seq_pos = image_patchify(img)
    jax.block_until_ready(seq_img)

    assert seq_img.shape == (PATCH_SIZE * PATCH_SIZE, FIXED_LENGTH, NUM_CHANNELS)
    assert seq_size.shape == (FIXED_LENGTH,)
    assert seq_pos.shape == (FIXED_LENGTH, 2)

    # Host-side numpy reference for the serialize stage (area-average resize of
    # each leaf to patch_size x patch_size, per-patch HWC, then the module's
    # reshape) -- loose tolerance to allow MXU bf16-pass rounding of f32 matmuls.
    img_np = np.asarray(jax.device_get(img)).astype(np.float32)
    ref = np.zeros((FIXED_LENGTH, PATCH_SIZE, PATCH_SIZE, NUM_CHANNELS), np.float32)
    for i in range(FIXED_LENGTH):
        y, x = int(seq_pos[i, 0]), int(seq_pos[i, 1])
        s = int(seq_size[i])
        f = s // PATCH_SIZE
        region = img_np[:, y:y + s, x:x + s].reshape(
            NUM_CHANNELS, PATCH_SIZE, f, PATCH_SIZE, f)
        ref[i] = region.mean(axis=(2, 4)).transpose(1, 2, 0)
    ref = ref.reshape(PATCH_SIZE * PATCH_SIZE, -1, NUM_CHANNELS)
    assert np.allclose(np.asarray(seq_img), ref, rtol=2e-2, atol=1.0), "serialize mismatch"

    print("KERNEL_OK")
</pallas_src>

<mosaic_0001>
module attributes {stable_mosaic.version = 11 : i64} {
  func.func @edge_kernel(%arg0: memref<3x68x68xf32, #tpu.memory_space<vmem>>, %arg1: memref<64x64xf32, #tpu.memory_space<vmem>>) attributes {dimension_semantics = [], scalar_prefetch = 0 : i64, scratch_operands = 0 : i64, tpu.core_type = #tpu.core_type<tc>} {
    %c0 = arith.constant 0 : index
    %c0_0 = arith.constant 0 : index
    %c0_1 = arith.constant 0 : index
    %0 = vector.load %arg0[%c0, %c0_0, %c0_1] : memref<3x68x68xf32, #tpu.memory_space<vmem>>, vector<1x68x68xf32>
    %1 = vector.shape_cast %0 : vector<1x68x68xf32> to vector<68x68xf32>
    %cst = arith.constant 2.990000e-01 : f32
    %2 = vector.broadcast %cst : f32 to vector<68x68xf32>
    %3 = arith.mulf %2, %1 : vector<68x68xf32>
    %c1 = arith.constant 1 : index
    %c0_2 = arith.constant 0 : index
    %c0_3 = arith.constant 0 : index
    %4 = vector.load %arg0[%c1, %c0_2, %c0_3] : memref<3x68x68xf32, #tpu.memory_space<vmem>>, vector<1x68x68xf32>
    %5 = vector.shape_cast %4 : vector<1x68x68xf32> to vector<68x68xf32>
    %cst_4 = arith.constant 5.870000e-01 : f32
    %6 = vector.broadcast %cst_4 : f32 to vector<68x68xf32>
    %7 = arith.mulf %6, %5 : vector<68x68xf32>
    %8 = arith.addf %3, %7 : vector<68x68xf32>
    %c2 = arith.constant 2 : index
    %c0_5 = arith.constant 0 : index
    %c0_6 = arith.constant 0 : index
    %9 = vector.load %arg0[%c2, %c0_5, %c0_6] : memref<3x68x68xf32, #tpu.memory_space<vmem>>, vector<1x68x68xf32>
    %10 = vector.shape_cast %9 : vector<1x68x68xf32> to vector<68x68xf32>
    %cst_7 = arith.constant 1.140000e-01 : f32
    %11 = vector.broadcast %cst_7 : f32 to vector<68x68xf32>
    %12 = arith.mulf %11, %10 : vector<68x68xf32>
    %13 = arith.addf %8, %12 : vector<68x68xf32>
    %14 = vector.extract_strided_slice %13 {offsets = [0, 0], sizes = [68, 66], strides = [1, 1]} : vector<68x68xf32> to vector<68x66xf32>
    %cst_8 = arith.constant 0.238994271 : f32
    %15 = vector.broadcast %cst_8 : f32 to vector<68x66xf32>
    %16 = arith.mulf %15, %14 : vector<68x66xf32>
    %17 = vector.extract_strided_slice %13 {offsets = [0, 1], sizes = [68, 66], strides = [1, 1]} : vector<68x68xf32> to vector<68x66xf32>
    %cst_9 = arith.constant 0.522011459 : f32
    %18 = vector.broadcast %cst_9 : f32 to vector<68x66xf32>
    %19 = arith.mulf %18, %17 : vector<68x66xf32>
    %20 = arith.addf %16, %19 : vector<68x66xf32>
    %21 = vector.extract_strided_slice %13 {offsets = [0, 2], sizes = [68, 66], strides = [1, 1]} : vector<68x68xf32> to vector<68x66xf32>
    %cst_10 = arith.constant 0.238994271 : f32
    %22 = vector.broadcast %cst_10 : f32 to vector<68x66xf32>
    %23 = arith.mulf %22, %21 : vector<68x66xf32>
    %24 = arith.addf %20, %23 : vector<68x66xf32>
    %25 = vector.extract_strided_slice %24 {offsets = [0, 0], sizes = [66, 66], strides = [1, 1]} : vector<68x66xf32> to vector<66x66xf32>
    %cst_11 = arith.constant 0.238994271 : f32
    %26 = vector.broadcast %cst_11 : f32 to vector<66x66xf32>
    %27 = arith.mulf %26, %25 : vector<66x66xf32>
    %28 = vector.extract_strided_slice %24 {offsets = [1, 0], sizes = [66, 66], strides = [1, 1]} : vector<68x66xf32> to vector<66x66xf32>
    %cst_12 = arith.constant 0.522011459 : f32
    %29 = vector.broadcast %cst_12 : f32 to vector<66x66xf32>
    %30 = arith.mulf %29, %28 : vector<66x66xf32>
    %31 = arith.addf %27, %30 : vector<66x66xf32>
    %32 = vector.extract_strided_slice %24 {offsets = [2, 0], sizes = [66, 66], strides = [1, 1]} : vector<68x66xf32> to vector<66x66xf32>
    %cst_13 = arith.constant 0.238994271 : f32
    %33 = vector.broadcast %cst_13 : f32 to vector<66x66xf32>
    %34 = arith.mulf %33, %32 : vector<66x66xf32>
    %35 = arith.addf %31, %34 : vector<66x66xf32>
    %36 = vector.extract_strided_slice %35 {offsets = [0, 0], sizes = [64, 66], strides = [1, 1]} : vector<66x66xf32> to vector<64x66xf32>
    %37 = vector.extract_strided_slice %35 {offsets = [1, 0], sizes = [64, 66], strides = [1, 1]} : vector<66x66xf32> to vector<64x66xf32>
    %cst_14 = arith.constant 2.000000e+00 : f32
    %38 = vector.broadcast %cst_14 : f32 to vector<64x66xf32>
    %39 = arith.mulf %38, %37 : vector<64x66xf32>
    %40 = arith.addf %36, %39 : vector<64x66xf32>
    %41 = vector.extract_strided_slice %35 {offsets = [2, 0], sizes = [64, 66], strides = [1, 1]} : vector<66x66xf32> to vector<64x66xf32>
    %42 = arith.addf %40, %41 : vector<64x66xf32>
    %43 = vector.extract_strided_slice %42 {offsets = [0, 2], sizes = [64, 64], strides = [1, 1]} : vector<64x66xf32> to vector<64x64xf32>
    %44 = vector.extract_strided_slice %42 {offsets = [0, 0], sizes = [64, 64], strides = [1, 1]} : vector<64x66xf32> to vector<64x64xf32>
    %45 = arith.subf %43, %44 : vector<64x64xf32>
    %46 = vector.extract_strided_slice %35 {offsets = [0, 0], sizes = [66, 64], strides = [1, 1]} : vector<66x66xf32> to vector<66x64xf32>
    %47 = vector.extract_strided_slice %35 {offsets = [0, 1], sizes = [66, 64], strides = [1, 1]} : vector<66x66xf32> to vector<66x64xf32>
    %cst_15 = arith.constant 2.000000e+00 : f32
    %48 = vector.broadcast %cst_15 : f32 to vector<66x64xf32>
    %49 = arith.mulf %48, %47 : vector<66x64xf32>
    %50 = arith.addf %46, %49 : vector<66x64xf32>
    %51 = vector.extract_strided_slice %35 {offsets = [0, 2], sizes = [66, 64], strides = [1, 1]} : vector<66x66xf32> to vector<66x64xf32>
    %52 = arith.addf %50, %51 : vector<66x64xf32>
    %53 = vector.extract_strided_slice %52 {offsets = [2, 0], sizes = [64, 64], strides = [1, 1]} : vector<66x64xf32> to vector<64x64xf32>
    %54 = vector.extract_strided_slice %52 {offsets = [0, 0], sizes = [64, 64], strides = [1, 1]} : vector<66x64xf32> to vector<64x64xf32>
    %55 = arith.subf %53, %54 : vector<64x64xf32>
    %56 = arith.mulf %45, %45 : vector<64x64xf32>
    %57 = arith.mulf %55, %55 : vector<64x64xf32>
    %58 = arith.addf %56, %57 : vector<64x64xf32>
    %cst_16 = arith.constant 1.562500e+04 : f32
    %59 = vector.broadcast %cst_16 : f32 to vector<64x64xf32>
    %60 = arith.cmpf oge, %58, %59 : vector<64x64xf32>
    %cst_17 = arith.constant 2.550000e+02 : f32
    %cst_18 = arith.constant 0.000000e+00 : f32
    %61 = vector.broadcast %cst_17 : f32 to vector<64x64xf32>
    %62 = vector.broadcast %cst_18 : f32 to vector<64x64xf32>
    %63 = arith.select %60, %61, %62 : vector<64x64xi1>, vector<64x64xf32>
    %c0_19 = arith.constant 0 : index
    %c0_20 = arith.constant 0 : index
    %64 = vector.load %arg1[%c0_19, %c0_20] : memref<64x64xf32, #tpu.memory_space<vmem>>, vector<64x64xf32>
    tpu.vector_store %arg1[%c0_19, %c0_20], %63 {strides = array<i32>} : memref<64x64xf32, #tpu.memory_space<vmem>>, vector<64x64xf32>,
    return
  }
}

</mosaic_0001>

<llo_original>
// kernel: tpu_custom_call.1
$region0: #{tpu_custom_call.1}
  #allocation0 [shape = 'u32[]', space=smem, size = 0x4, offset = 0x4, fixed_abs, tag = 'smem constant byte address 0x4 - core index']
  #allocation1 [shape = 'u32[144,128]{1,0:T(1,128)}', space=vmem, size = 0x12000, scoped, tag = 'internal scratch']
  %s0 = inlined_call_operand.hbm [shape: f32[3,68,68], index: 0, kind: input, shape index: {}]
  %s1 = inlined_call_operand.hbm [shape: f32[64,64], index: 1, kind: output, shape index: {}]
  %s2 = sld [smem:[#allocation0]]
  $region18: #{tpu_custom_call.1} parent=0
    _
  %s4 = ssub.s32 1, %s2
  %s5 = scalar_select 0, %s4, %s2
  $region1: #{tpu_custom_call.1} parent=0
    #allocation2 [shape = 'u8[110592]{0}', space=vmem, size = 0x1b000, scoped, tag = 'input window, operand 0, single buffered']
    #allocation3 [shape = 's32[1]{0}', space=sflag, size = 0x4, scoped, tag = 'scoped memory for tpu_custom_call.1']
    #allocation4 [shape = 's32[1]{0}', space=sflag, size = 0x4, scoped, tag = 'scoped memory for tpu_custom_call.1']
    #allocation5 [shape = 'u8[32768]{0}', space=vmem, size = 0x8000, scoped, tag = 'output window, operand 0, single buffered']
    %6 = vsyncpa [#allocation3], 0
    %7 = vsyncpa [#allocation4], 0
    // Predicated region
    $region2: #{tpu_custom_call.1} parent=1 // pred_check
      _
    $region3: #{tpu_custom_call.1} parent=1 // pred_check_branch
      %9 = sbr.rel (0) target = $region5
    $region4: #{tpu_custom_call.1} parent=1 // pred_region
      %s11 = ssub.s32 3456, 3456
      %12 = vsyncadd [#allocation3], %s11
      %s13 = sshll.u32 [#allocation2], 4
      %s14 = int_to_ptr.vmem [resolvable:$true] %s13
      %19 = dma.hbm_to_vmem [thread:$0]  %s0, 3456, %s14, [#allocation3], 128, 128, 8
    $region5: #{tpu_custom_call.1} parent=1 // pred_fallthru
      _
    // Predicated region
    $region6: #{tpu_custom_call.1} parent=1 // pred_check
      _
    $region7: #{tpu_custom_call.1} parent=1 // pred_check_branch
      %21 = sbr.rel (0) target = $region9
    $region8: #{tpu_custom_call.1} parent=1 // pred_region
      %22 = dma.done [#allocation3], 3456
    $region9: #{tpu_custom_call.1} parent=1 // pred_fallthru
      _
    %v23 = vld [vmem:[#allocation2] sm:$0xff]
    %v24 = vld [vmem:[#allocation2 + $0x8] sm:$0xff]
    %v25 = vld [vmem:[#allocation2 + $0x10] sm:$0xff]
    %v26 = vld [vmem:[#allocation2 + $0x18] sm:$0xff]
    %v27 = vld [vmem:[#allocation2 + $0x20] sm:$0xff]
    %v28 = vld [vmem:[#allocation2 + $0x28] sm:$0xff]
    %v29 = vld [vmem:[#allocation2 + $0x30] sm:$0xff]
    %v30 = vld [vmem:[#allocation2 + $0x38] sm:$0xff]
    %v31 = vld [vmem:[#allocation2 + $0x40] sm:$0xf]
    %v32 = vmul.f32 %v23, 0.299
    %v33 = vmul.f32 %v24, 0.299
    %v34 = vmul.f32 %v25, 0.299
    %v35 = vmul.f32 %v26, 0.299
    %v36 = vmul.f32 %v27, 0.299
    %v37 = vmul.f32 %v28, 0.299
    %v38 = vmul.f32 %v29, 0.299
    %v39 = vmul.f32 %v30, 0.299
    %v40 = vmul.f32 %v31, 0.299
    %s41 = scalar_lea.vmem [#allocation2], 72
    %v42 = vld [vmem:[%s41] sm:$0xff]
    %v43 = vld [vmem:[%s41 + $0x8] sm:$0xff]
    %v44 = vld [vmem:[%s41 + $0x10] sm:$0xff]
    %v45 = vld [vmem:[%s41 + $0x18] sm:$0xff]
    %v46 = vld [vmem:[%s41 + $0x20] sm:$0xff]
    %v47 = vld [vmem:[%s41 + $0x28] sm:$0xff]
    %v48 = vld [vmem:[%s41 + $0x30] sm:$0xff]
    %v49 = vld [vmem:[%s41 + $0x38] sm:$0xff]
    %v50 = vld [vmem:[%s41 + $0x40] sm:$0xf]
    %v51 = vmul.f32 %v42, 0.587
    %v52 = vmul.f32 %v43, 0.587
    %v53 = vmul.f32 %v44, 0.587
    %v54 = vmul.f32 %v45, 0.587
    %v55 = vmul.f32 %v46, 0.587
    %v56 = vmul.f32 %v47, 0.587
    %v57 = vmul.f32 %v48, 0.587
    %v58 = vmul.f32 %v49, 0.587
    %v59 = vmul.f32 %v50, 0.587
    %v60 = vadd.f32 %v32, %v51
    %v61 = vadd.f32 %v33, %v52
    %v62 = vadd.f32 %v34, %v53
    %v63 = vadd.f32 %v35, %v54
    %v64 = vadd.f32 %v36, %v55
    %v65 = vadd.f32 %v37, %v56
    %v66 = vadd.f32 %v38, %v57
    %v67 = vadd.f32 %v39, %v58
    %v68 = vadd.f32 %v40, %v59
    %s69 = scalar_lea.vmem [#allocation2], 144
    %v70 = vld [vmem:[%s69] sm:$0xff]
    %v71 = vld [vmem:[%s69 + $0x8] sm:$0xff]
    %v72 = vld [vmem:[%s69 + $0x10] sm:$0xff]
    %v73 = vld [vmem:[%s69 + $0x18] sm:$0xff]
    %v74 = vld [vmem:[%s69 + $0x20] sm:$0xff]
    %v75 = vld [vmem:[%s69 + $0x28] sm:$0xff]
    %v76 = vld [vmem:[%s69 + $0x30] sm:$0xff]
    %v77 = vld [vmem:[%s69 + $0x38] sm:$0xff]
    %v78 = vld [vmem:[%s69 + $0x40] sm:$0xf]
    %v79 = vmul.f32 %v70, 0.114
    %v80 = vmul.f32 %v71, 0.114
    %v81 = vmul.f32 %v72, 0.114
    %v82 = vmul.f32 %v73, 0.114
    %v83 = vmul.f32 %v74, 0.114
    %v84 = vmul.f32 %v75, 0.114
    %v85 = vmul.f32 %v76, 0.114
    %v86 = vmul.f32 %v77, 0.114
    %v87 = vmul.f32 %v78, 0.114
    %v88 = vadd.f32 %v60, %v79
    %v89 = vadd.f32 %v61, %v80
    %v90 = vadd.f32 %v62, %v81
    %v91 = vadd.f32 %v63, %v82
    %v92 = vadd.f32 %v64, %v83
    %v93 = vadd.f32 %v65, %v84
    %v94 = vadd.f32 %v66, %v85
    %v95 = vadd.f32 %v67, %v86
    %v96 = vadd.f32 %v68, %v87
    %v97 = vmul.f32 %v88, 0.23899427
    %v98 = vmul.f32 %v89, 0.23899427
    %v99 = vmul.f32 %v90, 0.23899427
    %v100 = vmul.f32 %v91, 0.23899427
    %v101 = vmul.f32 %v92, 0.23899427
    %v102 = vmul.f32 %v93, 0.23899427
    %v103 = vmul.f32 %v94, 0.23899427
    %v104 = vmul.f32 %v95, 0.23899427
    %v105 = vmul.f32 %v96, 0.23899427
    %v106 = vmul.f32 %v88, 0.52201146
    %v107 = vmul.f32 %v89, 0.52201146
    %v108 = vmul.f32 %v90, 0.52201146
    %v109 = vmul.f32 %v91, 0.52201146
    %v110 = vmul.f32 %v92, 0.52201146
    %v111 = vmul.f32 %v93, 0.52201146
    %v112 = vmul.f32 %v94, 0.52201146
    %v113 = vmul.f32 %v95, 0.52201146
    %v114 = vmul.f32 %v96, 0.52201146
    %124 = vrot.lane.b32.xlu0 %v106, 127
    %v125 = vpop.permute.xlu0 %124
    %126 = vrot.lane.b32.xlu0 %v107, 127
    %v127 = vpop.permute.xlu0 %126
    %128 = vrot.lane.b32.xlu0 %v108, 127
    %v129 = vpop.permute.xlu0 %128
    %130 = vrot.lane.b32.xlu0 %v109, 127
    %v131 = vpop.permute.xlu0 %130
    %132 = vrot.lane.b32.xlu0 %v110, 127
    %v133 = vpop.permute.xlu0 %132
    %134 = vrot.lane.b32.xlu0 %v111, 127
    %v135 = vpop.permute.xlu0 %134
    %136 = vrot.lane.b32.xlu0 %v112, 127
    %v137 = vpop.permute.xlu0 %136
    %138 = vrot.lane.b32.xlu0 %v113, 127
    %v139 = vpop.permute.xlu0 %138
    %140 = vrot.lane.b32.xlu0 %v114, 127
    %v141 = vpop.permute.xlu0 %140
    %v151 = vadd.f32 %v97, %v125
    %v152 = vadd.f32 %v98, %v127
    %v153 = vadd.f32 %v99, %v129
    %v154 = vadd.f32 %v100, %v131
    %v155 = vadd.f32 %v101, %v133
    %v156 = vadd.f32 %v102, %v135
    %v157 = vadd.f32 %v103, %v137
    %v158 = vadd.f32 %v104, %v139
    %v159 = vadd.f32 %v105, %v141
    %169 = vrot.lane.b32.xlu0 %v97, 126
    %v170 = vpop.permute.xlu0 %169
    %171 = vrot.lane.b32.xlu0 %v98, 126
    %v172 = vpop.permute.xlu0 %171
    %173 = vrot.lane.b32.xlu0 %v99, 126
    %v174 = vpop.permute.xlu0 %173
    %175 = vrot.lane.b32.xlu0 %v100, 126
    %v176 = vpop.permute.xlu0 %175
    %177 = vrot.lane.b32.xlu0 %v101, 126
    %v178 = vpop.permute.xlu0 %177
    %179 = vrot.lane.b32.xlu0 %v102, 126
    %v180 = vpop.permute.xlu0 %179
    %181 = vrot.lane.b32.xlu0 %v103, 126
    %v182 = vpop.permute.xlu0 %181
    %183 = vrot.lane.b32.xlu0 %v104, 126
    %v184 = vpop.permute.xlu0 %183
    %185 = vrot.lane.b32.xlu0 %v105, 126
    %v186 = vpop.permute.xlu0 %185
    %v196 = vadd.f32 %v151, %v170
    %v197 = vadd.f32 %v152, %v172
    %v198 = vadd.f32 %v153, %v174
    %v199 = vadd.f32 %v154, %v176
    %v200 = vadd.f32 %v155, %v178
    %v201 = vadd.f32 %v156, %v180
    %v202 = vadd.f32 %v157, %v182
    %v203 = vadd.f32 %v158, %v184
    %v204 = vadd.f32 %v159, %v186
    %v205 = vmul.f32 %v196, 0.23899427
    %v206 = vmul.f32 %v197, 0.23899427
    %v207 = vmul.f32 %v198, 0.23899427
    %v208 = vmul.f32 %v199, 0.23899427
    %v209 = vmul.f32 %v200, 0.23899427
    %v210 = vmul.f32 %v201, 0.23899427
    %v211 = vmul.f32 %v202, 0.23899427
    %v212 = vmul.f32 %v203, 0.23899427
    %v213 = vmul.f32 %v204, 0.23899427
    %v214 = vmul.f32 %v196, 0.52201146
    %v215 = vmul.f32 %v197, 0.52201146
    %v216 = vmul.f32 %v198, 0.52201146
    %v217 = vmul.f32 %v199, 0.52201146
    %v218 = vmul.f32 %v200, 0.52201146
    %v219 = vmul.f32 %v201, 0.52201146
    %v220 = vmul.f32 %v202, 0.52201146
    %v221 = vmul.f32 %v203, 0.52201146
    %v222 = vmul.f32 %v204, 0.52201146
    %vm232 = vcmask 1046528
    %v233 = vrot.slane %v214, 1
    %v234 = vrot.slane %v215, 1
    %v235 = vsel %vm232, %v233, %v234
    %v236 = vrot.slane %v216, 1
    %v237 = vsel %vm232, %v234, %v236
    %v238 = vrot.slane %v217, 1
    %v239 = vsel %vm232, %v236, %v238
    %v240 = vrot.slane %v218, 1
    %v241 = vsel %vm232, %v238, %v240
    %v242 = vrot.slane %v219, 1
    %v243 = vsel %vm232, %v240, %v242
    %v244 = vrot.slane %v220, 1
    %v245 = vsel %vm232, %v242, %v244
    %v246 = vrot.slane %v221, 1
    %v247 = vsel %vm232, %v244, %v246
    %v248 = vrot.slane %v222, 1
    %v249 = vsel %vm232, %v246, %v248
    %v259 = vadd.f32 %v205, %v235
    %v260 = vadd.f32 %v206, %v237
    %v261 = vadd.f32 %v207, %v239
    %v262 = vadd.f32 %v208, %v241
    %v263 = vadd.f32 %v209, %v243
    %v264 = vadd.f32 %v210, %v245
    %v265 = vadd.f32 %v211, %v247
    %v266 = vadd.f32 %v212, %v249
    %v267 = vadd.f32 %v213, %v248
    %vm277 = vcmask 1045504
    %v278 = vrot.slane %v205, 2
    %v279 = vrot.slane %v206, 2
    %v280 = vsel %vm277, %v278, %v279
    %v281 = vrot.slane %v207, 2
    %v282 = vsel %vm277, %v279, %v281
    %v283 = vrot.slane %v208, 2
    %v284 = vsel %vm277, %v281, %v283
    %v285 = vrot.slane %v209, 2
    %v286 = vsel %vm277, %v283, %v285
    %v287 = vrot.slane %v210, 2
    %v288 = vsel %vm277, %v285, %v287
    %v289 = vrot.slane %v211, 2
    %v290 = vsel %vm277, %v287, %v289
    %v291 = vrot.slane %v212, 2
    %v292 = vsel %vm277, %v289, %v291
    %v293 = vrot.slane %v213, 2
    %v294 = vsel %vm277, %v291, %v293
    %v304 = vadd.f32 %v259, %v280
    %v305 = vadd.f32 %v260, %v282
    %v306 = vadd.f32 %v261, %v284
    %v307 = vadd.f32 %v262, %v286
    %v308 = vadd.f32 %v263, %v288
    %v309 = vadd.f32 %v264, %v290
    %v310 = vadd.f32 %v265, %v292
    %v311 = vadd.f32 %v266, %v294
    %v312 = vadd.f32 %v267, %v293
    %v313 = vmul.f32 %v304, 2.0
    %v314 = vmul.f32 %v305, 2.0
    %v315 = vmul.f32 %v306, 2.0
    %v316 = vmul.f32 %v307, 2.0
    %v317 = vmul.f32 %v308, 2.0
    %v318 = vmul.f32 %v309, 2.0
    %v319 = vmul.f32 %v310, 2.0
    %v320 = vmul.f32 %v311, 2.0
    %v321 = vmul.f32 %v312, 2.0
    %v331 = vrot.slane %v313, 1
    %v332 = vrot.slane %v314, 1
    %v333 = vsel %vm232, %v331, %v332
    %v334 = vrot.slane %v315, 1
    %v335 = vsel %vm232, %v332, %v334
    %v336 = vrot.slane %v316, 1
    %v337 = vsel %vm232, %v334, %v336
    %v338 = vrot.slane %v317, 1
    %v339 = vsel %vm232, %v336, %v338
    %v340 = vrot.slane %v318, 1
    %v341 = vsel %vm232, %v338, %v340
    %v342 = vrot.slane %v319, 1
    %v343 = vsel %vm232, %v340, %v342
    %v344 = vrot.slane %v320, 1
    %v345 = vsel %vm232, %v342, %v344
    %v346 = vrot.slane %v321, 1
    %v347 = vsel %vm232, %v344, %v346
    %v356 = vadd.f32 %v304, %v333
    %v357 = vadd.f32 %v305, %v335
    %v358 = vadd.f32 %v306, %v337
    %v359 = vadd.f32 %v307, %v339
    %v360 = vadd.f32 %v308, %v341
    %v361 = vadd.f32 %v309, %v343
    %v362 = vadd.f32 %v310, %v345
    %v363 = vadd.f32 %v311, %v347
    %v373 = vrot.slane %v304, 2
    %v374 = vrot.slane %v305, 2
    %v375 = vsel %vm277, %v373, %v374
    %v376 = vrot.slane %v306, 2
    %v377 = vsel %vm277, %v374, %v376
    %v378 = vrot.slane %v307, 2
    %v379 = vsel %vm277, %v376, %v378
    %v380 = vrot.slane %v308, 2
    %v381 = vsel %vm277, %v378, %v380
    %v382 = vrot.slane %v309, 2
    %v383 = vsel %vm277, %v380, %v382
    %v384 = vrot.slane %v310, 2
    %v385 = vsel %vm277, %v382, %v384
    %v386 = vrot.slane %v311, 2
    %v387 = vsel %vm277, %v384, %v386
    %v388 = vrot.slane %v312, 2
    %v389 = vsel %vm277, %v386, %v388
    %v398 = vadd.f32 %v356, %v375
    %v399 = vadd.f32 %v357, %v377
    %v400 = vadd.f32 %v358, %v379
    %v401 = vadd.f32 %v359, %v381
    %v402 = vadd.f32 %v360, %v383
    %v403 = vadd.f32 %v361, %v385
    %v404 = vadd.f32 %v362, %v387
    %v405 = vadd.f32 %v363, %v389
    %414 = vrot.lane.b32.xlu0 %v398, 2
    %v415 = vpop.permute.xlu0 %414
    %416 = vrot.lane.b32.xlu0 %v399, 2
    %v417 = vpop.permute.xlu0 %416
    %418 = vrot.lane.b32.xlu0 %v400, 2
    %v419 = vpop.permute.xlu0 %418
    %420 = vrot.lane.b32.xlu0 %v401, 2
    %v421 = vpop.permute.xlu0 %420
    %422 = vrot.lane.b32.xlu0 %v402, 2
    %v423 = vpop.permute.xlu0 %422
    %424 = vrot.lane.b32.xlu0 %v403, 2
    %v425 = vpop.permute.xlu0 %424
    %426 = vrot.lane.b32.xlu0 %v404, 2
    %v427 = vpop.permute.xlu0 %426
    %428 = vrot.lane.b32.xlu0 %v405, 2
    %v429 = vpop.permute.xlu0 %428
    %v438 = vsub.f32 %v398, %v415
    %v439 = vsub.f32 %v399, %v417
    %v440 = vsub.f32 %v400, %v419
    %v441 = vsub.f32 %v401, %v421
    %v442 = vsub.f32 %v402, %v423
    %v443 = vsub.f32 %v403, %v425
    %v444 = vsub.f32 %v404, %v427
    %v445 = vsub.f32 %v405, %v429
    %446 = vrot.lane.b32.xlu0 %v313, 127
    %v447 = vpop.permute.xlu0 %446
    %448 = vrot.lane.b32.xlu0 %v314, 127
    %v449 = vpop.permute.xlu0 %448
    %450 = vrot.lane.b32.xlu0 %v315, 127
    %v451 = vpop.permute.xlu0 %450
    %452 = vrot.lane.b32.xlu0 %v316, 127
    %v453 = vpop.permute.xlu0 %452
    %454 = vrot.lane.b32.xlu0 %v317, 127
    %v455 = vpop.permute.xlu0 %454
    %456 = vrot.lane.b32.xlu0 %v318, 127
    %v457 = vpop.permute.xlu0 %456
    %458 = vrot.lane.b32.xlu0 %v319, 127
    %v459 = vpop.permute.xlu0 %458
    %460 = vrot.lane.b32.xlu0 %v320, 127
    %v461 = vpop.permute.xlu0 %460
    %462 = vrot.lane.b32.xlu0 %v321, 127
    %v463 = vpop.permute.xlu0 %462
    %v473 = vadd.f32 %v304, %v447
    %v474 = vadd.f32 %v305, %v449
    %v475 = vadd.f32 %v306, %v451
    %v476 = vadd.f32 %v307, %v453
    %v477 = vadd.f32 %v308, %v455
    %v478 = vadd.f32 %v309, %v457
    %v479 = vadd.f32 %v310, %v459
    %v480 = vadd.f32 %v311, %v461
    %v481 = vadd.f32 %v312, %v463
    %482 = vrot.lane.b32.xlu0 %v304, 126
    %v483 = vpop.permute.xlu0 %482
    %484 = vrot.lane.b32.xlu0 %v305, 126
    %v485 = vpop.permute.xlu0 %484
    %486 = vrot.lane.b32.xlu0 %v306, 126
    %v487 = vpop.permute.xlu0 %486
    %488 = vrot.lane.b32.xlu0 %v307, 126
    %v489 = vpop.permute.xlu0 %488
    %490 = vrot.lane.b32.xlu0 %v308, 126
    %v491 = vpop.permute.xlu0 %490
    %492 = vrot.lane.b32.xlu0 %v309, 126
    %v493 = vpop.permute.xlu0 %492
    %494 = vrot.lane.b32.xlu0 %v310, 126
    %v495 = vpop.permute.xlu0 %494
    %496 = vrot.lane.b32.xlu0 %v311, 126
    %v497 = vpop.permute.xlu0 %496
    %498 = vrot.lane.b32.xlu0 %v312, 126
    %v499 = vpop.permute.xlu0 %498
    %v509 = vadd.f32 %v473, %v483
    %v510 = vadd.f32 %v474, %v485
    %v511 = vadd.f32 %v475, %v487
    %v512 = vadd.f32 %v476, %v489
    %v513 = vadd.f32 %v477, %v491
    %v514 = vadd.f32 %v478, %v493
    %v515 = vadd.f32 %v479, %v495
    %v516 = vadd.f32 %v480, %v497
    %v517 = vadd.f32 %v481, %v499
    %vm526 = vcmask 1041408
    %v527 = vrot.slane %v509, 6
    %v528 = vrot.slane %v510, 6
    %v529 = vsel %vm526, %v527, %v528
    %v530 = vrot.slane %v511, 6
    %v531 = vsel %vm526, %v528, %v530
    %v532 = vrot.slane %v512, 6
    %v533 = vsel %vm526, %v530, %v532
    %v534 = vrot.slane %v513, 6
    %v535 = vsel %vm526, %v532, %v534
    %v536 = vrot.slane %v514, 6
    %v537 = vsel %vm526, %v534, %v536
    %v538 = vrot.slane %v515, 6
    %v539 = vsel %vm526, %v536, %v538
    %v540 = vrot.slane %v516, 6
    %v541 = vsel %vm526, %v538, %v540
    %v551 = vsub.f32 %v509, %v527
    %v552 = vsub.f32 %v510, %v529
    %v553 = vsub.f32 %v511, %v531
    %v554 = vsub.f32 %v512, %v533
    %v555 = vsub.f32 %v513, %v535
    %v556 = vsub.f32 %v514, %v537
    %v557 = vsub.f32 %v515, %v539
    %v558 = vsub.f32 %v516, %v541
    %v559 = vsub.f32 %v517, %v540
    %v560 = vmul.f32 %v438, %v438
    %v561 = vmul.f32 %v439, %v439
    %v562 = vmul.f32 %v440, %v440
    %v563 = vmul.f32 %v441, %v441
    %v564 = vmul.f32 %v442, %v442
    %v565 = vmul.f32 %v443, %v443
    %v566 = vmul.f32 %v444, %v444
    %v567 = vmul.f32 %v445, %v445
    %v568 = vmul.f32 %v551, %v551
    %v569 = vmul.f32 %v552, %v552
    %v570 = vmul.f32 %v553, %v553
    %v571 = vmul.f32 %v554, %v554
    %v572 = vmul.f32 %v555, %v555
    %v573 = vmul.f32 %v556, %v556
    %v574 = vmul.f32 %v557, %v557
    %v575 = vmul.f32 %v558, %v558
    %v576 = vmul.f32 %v559, %v559
    %v586 = vrot.slane %v568, 2
    %v587 = vrot.slane %v569, 2
    %v588 = vsel %vm277, %v586, %v587
    %v589 = vrot.slane %v570, 2
    %v590 = vsel %vm277, %v587, %v589
    %v591 = vrot.slane %v571, 2
    %v592 = vsel %vm277, %v589, %v591
    %v593 = vrot.slane %v572, 2
    %v594 = vsel %vm277, %v591, %v593
    %v595 = vrot.slane %v573, 2
    %v596 = vsel %vm277, %v593, %v595
    %v597 = vrot.slane %v574, 2
    %v598 = vsel %vm277, %v595, %v597
    %v599 = vrot.slane %v575, 2
    %v600 = vsel %vm277, %v597, %v599
    %v601 = vrot.slane %v576, 2
    %v602 = vsel %vm277, %v599, %v601
    %603 = vrot.lane.b32.xlu0 %v588, 2
    %v604 = vpop.permute.xlu0 %603
    %605 = vrot.lane.b32.xlu0 %v590, 2
    %v606 = vpop.permute.xlu0 %605
    %607 = vrot.lane.b32.xlu0 %v592, 2
    %v608 = vpop.permute.xlu0 %607
    %609 = vrot.lane.b32.xlu0 %v594, 2
    %v610 = vpop.permute.xlu0 %609
    %611 = vrot.lane.b32.xlu0 %v596, 2
    %v612 = vpop.permute.xlu0 %611
    %613 = vrot.lane.b32.xlu0 %v598, 2
    %v614 = vpop.permute.xlu0 %613
    %615 = vrot.lane.b32.xlu0 %v600, 2
    %v616 = vpop.permute.xlu0 %615
    %617 = vrot.lane.b32.xlu0 %v602, 2
    %v618 = vpop.permute.xlu0 %617
    %v627 = vadd.f32 %v560, %v604
    %v628 = vadd.f32 %v561, %v606
    %v629 = vadd.f32 %v562, %v608
    %v630 = vadd.f32 %v563, %v610
    %v631 = vadd.f32 %v564, %v612
    %v632 = vadd.f32 %v565, %v614
    %v633 = vadd.f32 %v566, %v616
    %v634 = vadd.f32 %v567, %v618
    %vm635 = vcmp.ge.f32.partialorder %v627, 15625.0
    %vm636 = vcmp.ge.f32.partialorder %v628, 15625.0
    %vm637 = vcmp.ge.f32.partialorder %v629, 15625.0
    %vm638 = vcmp.ge.f32.partialorder %v630, 15625.0
    %vm639 = vcmp.ge.f32.partialorder %v631, 15625.0
    %vm640 = vcmp.ge.f32.partialorder %v632, 15625.0
    %vm641 = vcmp.ge.f32.partialorder %v633, 15625.0
    %vm642 = vcmp.ge.f32.partialorder %v634, 15625.0
    %v643 = vsel %vm635, 255.0, 0.0
    %v644 = vsel %vm636, 255.0, 0.0
    %v645 = vsel %vm637, 255.0, 0.0
    %v646 = vsel %vm638, 255.0, 0.0
    %v647 = vsel %vm639, 255.0, 0.0
    %v648 = vsel %vm640, 255.0, 0.0
    %v649 = vsel %vm641, 255.0, 0.0
    %v650 = vsel %vm642, 255.0, 0.0
    %659 = vrot.lane.b32.xlu0 %v643, 126
    %v660 = vpop.permute.xlu0 %659
    %661 = vrot.lane.b32.xlu0 %v644, 126
    %v662 = vpop.permute.xlu0 %661
    %663 = vrot.lane.b32.xlu0 %v645, 126
    %v664 = vpop.permute.xlu0 %663
    %665 = vrot.lane.b32.xlu0 %v646, 126
    %v666 = vpop.permute.xlu0 %665
    %667 = vrot.lane.b32.xlu0 %v647, 126
    %v668 = vpop.permute.xlu0 %667
    %669 = vrot.lane.b32.xlu0 %v648, 126
    %v670 = vpop.permute.xlu0 %669
    %671 = vrot.lane.b32.xlu0 %v649, 126
    %v672 = vpop.permute.xlu0 %671
    %673 = vrot.lane.b32.xlu0 %v650, 126
    %v674 = vpop.permute.xlu0 %673
    %vm683 = vcmask 523264
    %684 = vst.msk [vmem:[#allocation5] sm:$0xff] %vm683, %v660
    %685 = vst.msk [vmem:[#allocation5 + $0x8] sm:$0xff] %vm683, %v662
    %686 = vst.msk [vmem:[#allocation5 + $0x10] sm:$0xff] %vm683, %v664
    %687 = vst.msk [vmem:[#allocation5 + $0x18] sm:$0xff] %vm683, %v666
    %688 = vst.msk [vmem:[#allocation5 + $0x20] sm:$0xff] %vm683, %v668
    %689 = vst.msk [vmem:[#allocation5 + $0x28] sm:$0xff] %vm683, %v670
    %690 = vst.msk [vmem:[#allocation5 + $0x30] sm:$0xff] %vm683, %v672
    %691 = vst.msk [vmem:[#allocation5 + $0x38] sm:$0xff] %vm683, %v674
    // Predicated region
    $region10: #{tpu_custom_call.1} parent=1 // pred_check
      _
    $region11: #{tpu_custom_call.1} parent=1 // pred_check_branch
      %693 = sbr.rel (0) target = $region13
    $region12: #{tpu_custom_call.1} parent=1 // pred_region
      %s695 = ssub.s32 1024, 1024
      %696 = vsyncadd [#allocation4], %s695
      %s697 = sshll.u32 [#allocation5], 4
      %s698 = int_to_ptr.vmem [resolvable:$true] %s697
      %703 = dma.vmem_to_hbm [thread:$0]  %s698, 1024, %s1, [#allocation4], 128, 128, 8
    $region13: #{tpu_custom_call.1} parent=1 // pred_fallthru
      _
    // Predicated region
    $region14: #{tpu_custom_call.1} parent=1 // pred_check
      _
    $region15: #{tpu_custom_call.1} parent=1 // pred_check_branch
      %705 = sbr.rel (0) target = $region17
    $region16: #{tpu_custom_call.1} parent=1 // pred_region
      %706 = dma.done [#allocation4], 1024
    $region17: #{tpu_custom_call.1} parent=1 // pred_fallthru
      _
    %707 = vsyncpa [#allocation3], 1
    %708 = vsyncpa [#allocation4], 1

</llo_original>
